<compile_context>
chip_gen: v7x
topology: tpu7x:2x2x1
jax: 0.10.0
libtpu: 0.0.40
codegen_flags: <defaults>
</compile_context>

<pallas_src>
import functools

import jax
import jax.numpy as jnp
from jax import lax
from jax.experimental import pallas as pl
from jax.experimental.pallas import tpu as pltpu


def _abs_power(diff, n_exp):
    """|diff| ** n_exp with integer-power specialization (VPU-only for int N)."""
    if isinstance(n_exp, int):
        if n_exp == 0:
            return jnp.ones_like(diff)               # torch: |x|**0 == 1
        if n_exp % 2 == 0:
            return lax.integer_pow(diff, n_exp)      # even power: |x|^n == x^n
        return lax.integer_pow(jnp.abs(diff), n_exp)
    return jnp.abs(diff) ** jnp.float32(n_exp)       # fractional N (EUP path)


def _lnloss_kernel(pred_ref, tgt_ref, acc_ref, *, n_exp, blk, steps, rows,
                   num_blocks, guard_overcover, mask_last):
    i = pl.program_id(0)   # parallel partition (per-TensorCore row range)
    j = pl.program_id(1)   # reduction step within the partition
    block_index = i * steps + j

    @pl.when(j == 0)
    def _():
        acc_ref[...] = jnp.zeros_like(acc_ref)

    p = pred_ref[...].astype(jnp.float32)
    t = tgt_ref[...].astype(jnp.float32)
    val = _abs_power(p - t, n_exp)

    def accumulate(v):
        # Fold the block into an (8,128) vreg-shaped partial with VPU adds only.
        partial = v.reshape(blk // 8, 8, 128).sum(axis=0)
        acc_ref[...] += partial.reshape(1, 8, 128)

    last = num_blocks - 1

    def do_block():
        if mask_last:
            # Only the final block is ragged; interior blocks stay unmasked.
            @pl.when(block_index == last)
            def _():
                row = lax.broadcasted_iota(jnp.int32, (blk, 128), 0)
                valid = (block_index * blk + row) < rows   # row-granular, no *128
                accumulate(jnp.where(valid, val, jnp.float32(0.0)))

            @pl.when(block_index != last)
            def _():
                accumulate(val)
        else:
            accumulate(val)

    if guard_overcover:
        # Grid over-covers when num_blocks % parts != 0; skip the duplicate block.
        pl.when(block_index < num_blocks)(do_block)
    else:
        do_block()


def _default_partitions():
    """2 on dual-TensorCore chips (v7x), else 1 (v5e/v6e single TC)."""
    try:
        dev = jax.devices()[0]
        n_cores = getattr(dev, "num_cores", None)
        if n_cores is not None and int(n_cores) >= 2:
            return 2
        if "v7" in str(getattr(dev, "device_kind", "")).lower():
            return 2
    except Exception:
        pass
    return 1


def ln_loss(output, target, N, *, block_rows=4096, partitions=None):
    assert output.shape == target.shape, "output/target shape mismatch"
    total = int(output.size)
    if total == 0:
        return jnp.float32(jnp.nan)   # torch.mean of empty tensor -> nan

    # Static power: prefer the integer fast path when N is integral.
    n_exp = int(N) if float(N).is_integer() else float(N)

    flat_o = output.reshape(-1)
    flat_t = target.reshape(-1)

    aligned = (total // 128) * 128
    rows = aligned // 128

    # Tiny input: no kernel launch needed.
    if rows == 0:
        diff = flat_o.astype(jnp.float32) - flat_t.astype(jnp.float32)
        return jnp.sum(_abs_power(diff, n_exp)) / jnp.float32(total)

    if aligned == total:
        # Common case: zero-copy reshape, no padding, no tail.
        o2 = flat_o.reshape(rows, 128)
        t2 = flat_t.reshape(rows, 128)
        tail_sum = jnp.float32(0.0)
    else:
        # TODO(synk): non-multiple-of-128 sizes may pay one prefix-slice copy;
        # the <128-element tail is reduced in a negligible jnp epilogue.
        o2 = lax.slice(flat_o, (0,), (aligned,)).reshape(rows, 128)
        t2 = lax.slice(flat_t, (0,), (aligned,)).reshape(rows, 128)
        to = lax.slice(flat_o, (aligned,), (total,)).astype(jnp.float32)
        tt = lax.slice(flat_t, (aligned,), (total,)).astype(jnp.float32)
        tail_sum = jnp.sum(_abs_power(to - tt, n_exp))

    # Minimum sublane multiple per dtype packing (f32: 8, bf16: 16, int8: 32).
    def _min_sublanes(dt):
        return max(8, 32 // jnp.dtype(dt).itemsize)

    row_align = max(_min_sublanes(output.dtype), _min_sublanes(target.dtype))

    # Block sizing: as large as available rows, multiple of the dtype alignment.
    blk = min(block_rows, rows)
    blk -= blk % row_align
    blk = max(blk, row_align)
    num_blocks = pl.cdiv(rows, blk)

    if partitions is None:
        partitions = _default_partitions()
    parts = max(1, min(partitions, num_blocks))
    steps = pl.cdiv(num_blocks, parts)

    guard_overcover = (parts * steps) > num_blocks
    mask_last = (rows % blk) != 0

    kernel = functools.partial(
        _lnloss_kernel,
        n_exp=n_exp,
        blk=blk,
        steps=steps,
        rows=rows,
        num_blocks=num_blocks,
        guard_overcover=guard_overcover,
        mask_last=mask_last,
    )

    if guard_overcover:
        # Clamp so the auto-pipeline never DMAs a block fully past the array.
        idx_map = lambda i, j: (jnp.minimum(i * steps + j, num_blocks - 1), 0)
    else:
        idx_map = lambda i, j: (i * steps + j, 0)

    in_bytes = aligned * (output.dtype.itemsize + target.dtype.itemsize)
    cost = pl.CostEstimate(
        flops=4 * aligned,
        transcendentals=0 if isinstance(n_exp, int) else aligned,
        bytes_accessed=in_bytes + parts * 8 * 128 * 4,
    )

    # TODO(synk): on v7x, if a profile shows exposed DMA at large blk, add
    # pipeline_mode=pl.Buffered(3) to the two input BlockSpecs.
    partials = pl.pallas_call(
        kernel,
        out_shape=jax.ShapeDtypeStruct((parts, 8, 128), jnp.float32),
        grid_spec=pltpu.PrefetchScalarGridSpec(
            num_scalar_prefetch=0,
            grid=(parts, steps),
            in_specs=[
                pl.BlockSpec((blk, 128), idx_map),
                pl.BlockSpec((blk, 128), idx_map),
            ],
            out_specs=pl.BlockSpec((1, 8, 128), lambda i, j: (i, 0, 0)),
        ),
        compiler_params=pltpu.CompilerParams(
            dimension_semantics=("parallel", "arbitrary"),
            vmem_limit_bytes=32 * 1024 * 1024,
        ),
        cost_estimate=cost,
    )(o2, t2)

    # Tiny epilogue: one cross-lane reduce over (parts, 8, 128) + tail + divide.
    return (jnp.sum(partials) + tail_sum) / jnp.float32(total)


if __name__ == "__main__":
    key = jax.random.PRNGKey(0)
    k1, k2 = jax.random.split(key)

    # Small NCHW shapes consistent with a typical conv-net loss.
    output = jax.random.normal(k1, (2, 4, 16, 16), dtype=jnp.float32)
    target = jax.random.normal(k2, (2, 4, 16, 16), dtype=jnp.float32)
    N = 2  # the module's constructor parameter

    loss = ln_loss(output, target, N)
    jax.block_until_ready(loss)

    # Reference check against plain JAX (== PyTorch semantics).
    ref = jnp.mean(jnp.abs(output - target) ** N)
    assert jnp.allclose(loss, ref, rtol=1e-5, atol=1e-6), (loss, ref)

    print("KERNEL_OK")
</pallas_src>

<mosaic_0001>
module attributes {stable_mosaic.version = 11 : i64} {
  func.func @_lnloss_kernel(%arg0: i32, %arg1: i32, %arg2: memref<16x128xf32, #tpu.memory_space<vmem>>, %arg3: memref<16x128xf32, #tpu.memory_space<vmem>>, %arg4: memref<1x8x128xf32, #tpu.memory_space<vmem>>) attributes {dimension_semantics = [#tpu.dimension_semantics<parallel>, #tpu.dimension_semantics<arbitrary>], iteration_bounds = array<i64: 1, 1>, scalar_prefetch = 0 : i64, scratch_operands = 0 : i64, tpu.core_type = #tpu.core_type<tc>, window_params = [{transform_indices = @transform_0, window_bounds = array<i64: 16, 128>}, {transform_indices = @transform_1, window_bounds = array<i64: 16, 128>}, {transform_indices = @transform_2, window_bounds = array<i64: 1, 8, 128>}]} {
    %c0_i32 = arith.constant 0 : i32
    %0 = arith.cmpi eq, %arg1, %c0_i32 : i32
    %1 = arith.extui %0 : i1 to i32
    %c0_i32_0 = arith.constant 0 : i32
    %2 = arith.cmpi ne, %1, %c0_i32_0 : i32
    scf.if %2 {
      %cst_10 = arith.constant 0.000000e+00 : f32
      %13 = vector.broadcast %cst_10 : f32 to vector<1x8x128xf32>
      %c0_11 = arith.constant 0 : index
      %c0_12 = arith.constant 0 : index
      %c0_13 = arith.constant 0 : index
      %14 = vector.load %arg4[%c0_11, %c0_12, %c0_13] : memref<1x8x128xf32, #tpu.memory_space<vmem>>, vector<1x8x128xf32>
      tpu.vector_store %arg4[%c0_11, %c0_12, %c0_13], %13 {strides = array<i32>} : memref<1x8x128xf32, #tpu.memory_space<vmem>>, vector<1x8x128xf32>,
    } else {
    }
    %c0 = arith.constant 0 : index
    %c0_1 = arith.constant 0 : index
    %3 = vector.load %arg2[%c0, %c0_1] : memref<16x128xf32, #tpu.memory_space<vmem>>, vector<16x128xf32>
    %c0_2 = arith.constant 0 : index
    %c0_3 = arith.constant 0 : index
    %4 = vector.load %arg3[%c0_2, %c0_3] : memref<16x128xf32, #tpu.memory_space<vmem>>, vector<16x128xf32>
    %5 = arith.subf %3, %4 : vector<16x128xf32>
    %6 = arith.mulf %5, %5 : vector<16x128xf32>
    %7 = vector.shape_cast %6 : vector<16x128xf32> to vector<2x8x128xf32>
    %cst = arith.constant dense<0.000000e+00> : vector<8x128xf32>
    %8 = vector.multi_reduction <add>, %7, %cst [0] : vector<2x8x128xf32> to vector<8x128xf32>
    %c0_4 = arith.constant 0 : index
    %c0_5 = arith.constant 0 : index
    %c0_6 = arith.constant 0 : index
    %9 = vector.load %arg4[%c0_4, %c0_5, %c0_6] : memref<1x8x128xf32, #tpu.memory_space<vmem>>, vector<1x8x128xf32>
    %10 = vector.shape_cast %8 : vector<8x128xf32> to vector<1x8x128xf32>
    %11 = arith.addf %9, %10 : vector<1x8x128xf32>
    %c0_7 = arith.constant 0 : index
    %c0_8 = arith.constant 0 : index
    %c0_9 = arith.constant 0 : index
    %12 = vector.load %arg4[%c0_7, %c0_8, %c0_9] : memref<1x8x128xf32, #tpu.memory_space<vmem>>, vector<1x8x128xf32>
    tpu.vector_store %arg4[%c0_7, %c0_8, %c0_9], %11 {strides = array<i32>} : memref<1x8x128xf32, #tpu.memory_space<vmem>>, vector<1x8x128xf32>,
    return
  }
  func.func @transform_0(%arg0: i32, %arg1: i32) -> (i32, i32) {
    %c1_i32 = arith.constant 1 : i32
    %0 = arith.muli %arg0, %c1_i32 : i32
    %1 = arith.addi %0, %arg1 : i32
    %c0_i32 = arith.constant 0 : i32
    %c0_i32_0 = arith.constant 0 : i32
    return %1, %c0_i32 : i32, i32
  }
  func.func @transform_1(%arg0: i32, %arg1: i32) -> (i32, i32) {
    %c1_i32 = arith.constant 1 : i32
    %0 = arith.muli %arg0, %c1_i32 : i32
    %1 = arith.addi %0, %arg1 : i32
    %c0_i32 = arith.constant 0 : i32
    %c0_i32_0 = arith.constant 0 : i32
    return %1, %c0_i32 : i32, i32
  }
  func.func @transform_2(%arg0: i32, %arg1: i32) -> (i32, i32, i32) {
    %c0_i32 = arith.constant 0 : i32
    %c0_i32_0 = arith.constant 0 : i32
    %c0_i32_1 = arith.constant 0 : i32
    return %arg0, %c0_i32, %c0_i32_0 : i32, i32, i32
  }
}

</mosaic_0001>

<llo_original>
// kernel: tpu_custom_call.1
$region0: #{tpu_custom_call.1}
  #allocation0 [shape = 'u32[]', space=smem, size = 0x4, offset = 0x4, fixed_abs, tag = 'smem constant byte address 0x4 - core index']
  #allocation1 [shape = 'u32[144,128]{1,0:T(1,128)}', space=vmem, size = 0x12000, scoped, tag = 'internal scratch']
  %s0 = inlined_call_operand.hbm [shape: f32[16,128], index: 0, kind: input, shape index: {}]
  %s1 = inlined_call_operand.hbm [shape: f32[16,128], index: 1, kind: input, shape index: {}]
  %s2 = inlined_call_operand.hbm [shape: f32[1,8,128], index: 2, kind: output, shape index: {}]
  %s3 = sld [smem:[#allocation0]]
  $region30: #{tpu_custom_call.1} parent=0
    _
  %s5 = ssub.s32 1, %s3
  %s6 = scalar_select 0, %s5, %s3
  $region1: #{tpu_custom_call.1} parent=0
    #allocation2 [shape = 'u8[8192]{0}', space=vmem, size = 0x2000, scoped, tag = 'input window, operand 0, single buffered']
    #allocation3 [shape = 's32[1]{0}', space=sflag, size = 0x4, scoped, tag = 'scoped memory for tpu_custom_call.1']
    #allocation4 [shape = 's32[1]{0}', space=sflag, size = 0x4, scoped, tag = 'scoped memory for tpu_custom_call.1']
    #allocation5 [shape = 'u8[8192]{0}', space=vmem, size = 0x2000, scoped, tag = 'input window, operand 1, single buffered']
    #allocation6 [shape = 's32[1]{0}', space=sflag, size = 0x4, scoped, tag = 'scoped memory for tpu_custom_call.1']
    #allocation7 [shape = 'u8[4096]{0}', space=vmem, size = 0x1000, scoped, tag = 'output window, operand 0, single buffered']
    %7 = vsyncpa [#allocation3], 0
    %8 = vsyncpa [#allocation6], 0
    %9 = vsyncpa [#allocation4], 0
    // Predicated region
    $region2: #{tpu_custom_call.1} parent=1 // pred_check
      _
    $region3: #{tpu_custom_call.1} parent=1 // pred_check_branch
      %11 = sbr.rel (0) target = $region5
    $region4: #{tpu_custom_call.1} parent=1 // pred_region
      %s12 = sadd.s32 0, 0
      %s13 = smul.u32 2, %s12
      %s15 = ssub.s32 256, 256
      %16 = vsyncadd [#allocation3], %s15
      %s17 = smul.addr %s13, 128
      %s18 = scalar_lea.hbm %s0, %s17
      %s19 = sshll.u32 [#allocation2], 4
      %s20 = int_to_ptr.vmem [resolvable:$true] %s19
      %25 = dma.hbm_to_vmem [thread:$0]  %s18, 256, %s20, [#allocation3], 128, 128, 8
    $region5: #{tpu_custom_call.1} parent=1 // pred_fallthru
      _
    // Predicated region
    $region6: #{tpu_custom_call.1} parent=1 // pred_check
      _
    $region7: #{tpu_custom_call.1} parent=1 // pred_check_branch
      %27 = sbr.rel (0) target = $region9
    $region8: #{tpu_custom_call.1} parent=1 // pred_region
      %s28 = sadd.s32 0, 0
      %s29 = smul.u32 2, %s28
      %s31 = ssub.s32 256, 256
      %32 = vsyncadd [#allocation6], %s31
      %s33 = smul.addr %s29, 128
      %s34 = scalar_lea.hbm %s1, %s33
      %s35 = sshll.u32 [#allocation5], 4
      %s36 = int_to_ptr.vmem [resolvable:$true] %s35
      %41 = dma.hbm_to_vmem [thread:$0]  %s34, 256, %s36, [#allocation6], 128, 128, 8
    $region9: #{tpu_custom_call.1} parent=1 // pred_fallthru
      _
    // Predicated region
    $region10: #{tpu_custom_call.1} parent=1 // pred_check
      _
    $region11: #{tpu_custom_call.1} parent=1 // pred_check_branch
      %43 = sbr.rel (0) target = $region13
    $region12: #{tpu_custom_call.1} parent=1 // pred_region
      %44 = dma.done [#allocation3], 256
    $region13: #{tpu_custom_call.1} parent=1 // pred_fallthru
      _
    // Predicated region
    $region14: #{tpu_custom_call.1} parent=1 // pred_check
      _
    $region15: #{tpu_custom_call.1} parent=1 // pred_check_branch
      %46 = sbr.rel (0) target = $region17
    $region16: #{tpu_custom_call.1} parent=1 // pred_region
      %47 = dma.done [#allocation6], 256
    $region17: #{tpu_custom_call.1} parent=1 // pred_fallthru
      _
    %s48 = sadd.s32 0, 0
    %s49 = smul.u32 2, %s48
    %s50 = sadd.s32 0, 0
    %s51 = smul.u32 2, %s50
    %p52 = scmp.eq.s32.totalorder 0, 0
    // Predicated region
    $region18: #{tpu_custom_call.1} parent=1 // pred_check
      %p53 = pneg %p52
    $region19: #{tpu_custom_call.1} parent=1 // pred_check_branch
      %55 = sbr.rel (%p53) target = $region21
    $region20: #{tpu_custom_call.1} parent=1 // pred_region
      %56 = vst [vmem:[#allocation7] sm:$0xff] 0.0
    $region21: #{tpu_custom_call.1} parent=1 // pred_fallthru
      _
    %v57 = vld [vmem:[#allocation2] sm:$0xff]
    %v58 = vld [vmem:[#allocation2 + $0x8] sm:$0xff]
    %v59 = vld [vmem:[#allocation5] sm:$0xff]
    %v60 = vld [vmem:[#allocation5 + $0x8] sm:$0xff]
    %v61 = vsub.f32 %v57, %v59
    %v62 = vsub.f32 %v58, %v60
    %v63 = vmul.f32 %v61, %v61
    %v64 = vmul.f32 %v62, %v62
    %v65 = vadd.f32 %v63, %v64
    %v66 = vld [vmem:[#allocation7] sm:$0xff]
    %v67 = vadd.f32 %v66, %v65
    %68 = vst [vmem:[#allocation7] sm:$0xff] %v67
    // Predicated region
    $region22: #{tpu_custom_call.1} parent=1 // pred_check
      _
    $region23: #{tpu_custom_call.1} parent=1 // pred_check_branch
      %70 = sbr.rel (0) target = $region25
    $region24: #{tpu_custom_call.1} parent=1 // pred_region
      %s72 = ssub.s32 128, 128
      %73 = vsyncadd [#allocation4], %s72
      %s75 = sshll.u32 [#allocation7], 4
      %s76 = int_to_ptr.vmem [resolvable:$true] %s75
      %78 = dma.vmem_to_hbm [thread:$0]  %s76, 128, %s2, [#allocation4]
    $region25: #{tpu_custom_call.1} parent=1 // pred_fallthru
      _
    // Predicated region
    $region26: #{tpu_custom_call.1} parent=1 // pred_check
      _
    $region27: #{tpu_custom_call.1} parent=1 // pred_check_branch
      %80 = sbr.rel (0) target = $region29
    $region28: #{tpu_custom_call.1} parent=1 // pred_region
      %81 = dma.done [#allocation4], 128
    $region29: #{tpu_custom_call.1} parent=1 // pred_fallthru
      _
    %82 = vsyncpa [#allocation3], 1
    %83 = vsyncpa [#allocation6], 1
    %84 = vsyncpa [#allocation4], 1

</llo_original>
